<compile_context>
chip_gen: v6e
topology: v6e:2x2x1
jax: 0.10.0
libtpu: 0.0.40
codegen_flags: <defaults>
</compile_context>

<pallas_src>
import functools

import jax
import jax.numpy as jnp
from jax import lax
from jax.experimental import pallas as pl
from jax.experimental.pallas import tpu as pltpu


def _orthogonal_loss_kernel(vr_ref, vc_ref, o_ref, *, tm, tn):
    i = pl.program_id(0)
    j = pl.program_id(1)

    # ---- normalize rows before the matmul (rsqrt lowers to the EUP) ----
    vr = vr_ref[...]                          # [tm, D], input dtype
    vc = vc_ref[...]                          # [tn, D], input dtype
    vr32 = vr.astype(jnp.float32)
    vc32 = vc.astype(jnp.float32)
    inv_r = lax.rsqrt(jnp.sum(vr32 * vr32, axis=1, keepdims=True))
    inv_c = lax.rsqrt(jnp.sum(vc32 * vc32, axis=1, keepdims=True))
    # Feed the MXU in the input dtype (bf16 stays bf16); accumulate in f32.
    vrn = (vr32 * inv_r).astype(vr.dtype)
    vcn = (vc32 * inv_c).astype(vc.dtype)

    # Gram of normalized rows == cosine-similarity block.
    # Contract over D directly -> no materialized transpose.
    sim = lax.dot_general(
        vrn, vcn,
        dimension_numbers=(((1,), (1,)), ((), ())),
        preferred_element_type=jnp.float32,
    )                                          # [tm, tn] f32
    abs_sim = jnp.abs(sim)

    @pl.when(j == 0)
    def _init():
        o_ref[0, 0] = 0.0

    o_ref[0, 0] += jnp.sum(abs_sim)

    # Remove the diagonal contribution only on diagonal blocks (tm == tn),
    # so the iota/select cost is confined to the nb blocks on the diagonal.
    @pl.when(i == j)
    def _subtract_diag():
        r = lax.broadcasted_iota(jnp.int32, (tm, tn), 0)
        c = lax.broadcasted_iota(jnp.int32, (tm, tn), 1)
        o_ref[0, 0] -= jnp.sum(jnp.where(r == c, abs_sim, 0.0))


def _pick_tile(n: int) -> int:
    # Largest MXU-friendly square tile that divides N while respecting the
    # (8, 128) sublane rule (divisible by 8, or equal to the full extent).
    # 512 f32 keeps double-buffered inputs + the tile well under the v7x
    # 64 MiB / v5e 16 MiB scoped-VMEM limits for typical D.
    for t in (512, 256, 128, 64, 32, 16, 8):
        if n % t == 0:
            return t
    return n  # tiny N: single full-extent block


def orthogonal_loss(vectors: jax.Array, tile: int | None = None) -> jax.Array:
    """Pallas TPU implementation of OrthogonalLoss.forward.

    vectors: [N, D] float array. Returns a scalar float32 loss.
    """
    n, d = vectors.shape
    t = _pick_tile(n) if tile is None else tile
    assert n % t == 0, "tile must divide N"
    nb = n // t

    kernel = functools.partial(_orthogonal_loss_kernel, tm=t, tn=t)
    partials = pl.pallas_call(
        kernel,
        out_shape=jax.ShapeDtypeStruct((nb, 1), jnp.float32),
        grid=(nb, nb),
        in_specs=[
            pl.BlockSpec((t, d), lambda i, j: (i, 0)),   # row block of V
            pl.BlockSpec((t, d), lambda i, j: (j, 0)),   # col block of V
        ],
        out_specs=pl.BlockSpec(
            (1, 1), lambda i, j: (i, 0), memory_space=pltpu.SMEM
        ),
        compiler_params=pltpu.CompilerParams(
            dimension_semantics=("parallel", "arbitrary"),
        ),
    )(vectors, vectors)
    return 0.5 * jnp.sum(partials)


def orthogonal_loss_ref(vectors: jax.Array) -> jax.Array:
    """Pure-JAX reference mirroring the PyTorch module."""
    v = vectors.astype(jnp.float32)
    dot = v @ v.T
    norm = jnp.linalg.norm(v, axis=1, keepdims=True)
    sim = dot / (norm * norm.T)
    sim = sim - jnp.diag(jnp.diagonal(sim))
    return 0.5 * jnp.sum(jnp.abs(sim))


if __name__ == "__main__":
    key = jax.random.PRNGKey(0)

    # Small shape consistent with the module: N vectors of dimension D.
    N, D = 8, 32
    vectors = jax.random.normal(key, (N, D), dtype=jnp.float32)
    loss = jax.block_until_ready(orthogonal_loss(vectors))
    ref = jax.block_until_ready(orthogonal_loss_ref(vectors))
    assert jnp.allclose(loss, ref, rtol=1e-5, atol=1e-5), (loss, ref)

    # Exercise the tiled (multi-block) path with diagonal-block masking.
    N2, D2 = 32, 32
    vectors2 = jax.random.normal(jax.random.PRNGKey(1), (N2, D2), jnp.float32)
    loss2 = jax.block_until_ready(orthogonal_loss(vectors2, tile=16))
    ref2 = jax.block_until_ready(orthogonal_loss_ref(vectors2))
    assert jnp.allclose(loss2, ref2, rtol=1e-5, atol=1e-4), (loss2, ref2)

    print("KERNEL_OK")
</pallas_src>

<mosaic_0001>
module attributes {stable_mosaic.version = 11 : i64} {
  func.func @_orthogonal_loss_kernel(%arg0: i32, %arg1: i32, %arg2: memref<8x32xf32, #tpu.memory_space<vmem>>, %arg3: memref<8x32xf32, #tpu.memory_space<vmem>>, %arg4: memref<1x1xf32, #tpu.memory_space<smem>>) attributes {dimension_semantics = [#tpu.dimension_semantics<parallel>, #tpu.dimension_semantics<arbitrary>], iteration_bounds = array<i64: 1, 1>, scalar_prefetch = 0 : i64, scratch_operands = 0 : i64, tpu.core_type = #tpu.core_type<tc>, window_params = [{transform_indices = @transform_0, window_bounds = array<i64: 8, 32>}, {transform_indices = @transform_1, window_bounds = array<i64: 8, 32>}, {transform_indices = @transform_2, window_bounds = array<i64: 1, 1>}]} {
    %c0 = arith.constant 0 : index
    %c0_0 = arith.constant 0 : index
    %0 = vector.load %arg2[%c0, %c0_0] : memref<8x32xf32, #tpu.memory_space<vmem>>, vector<8x32xf32>
    %c0_1 = arith.constant 0 : index
    %c0_2 = arith.constant 0 : index
    %1 = vector.load %arg3[%c0_1, %c0_2] : memref<8x32xf32, #tpu.memory_space<vmem>>, vector<8x32xf32>
    %2 = arith.mulf %0, %0 : vector<8x32xf32>
    %cst = arith.constant dense<0.000000e+00> : vector<8xf32>
    %3 = vector.multi_reduction <add>, %2, %cst [1] : vector<8x32xf32> to vector<8xf32>
    %4 = vector.shape_cast %3 : vector<8xf32> to vector<8x1xf32>
    %5 = math.rsqrt %4 : vector<8x1xf32>
    %6 = arith.mulf %1, %1 : vector<8x32xf32>
    %cst_3 = arith.constant dense<0.000000e+00> : vector<8xf32>
    %7 = vector.multi_reduction <add>, %6, %cst_3 [1] : vector<8x32xf32> to vector<8xf32>
    %8 = vector.shape_cast %7 : vector<8xf32> to vector<8x1xf32>
    %9 = math.rsqrt %8 : vector<8x1xf32>
    %10 = vector.broadcast %5 : vector<8x1xf32> to vector<8x32xf32>
    %11 = arith.mulf %0, %10 : vector<8x32xf32>
    %12 = vector.broadcast %9 : vector<8x1xf32> to vector<8x32xf32>
    %13 = arith.mulf %1, %12 : vector<8x32xf32>
    %cst_4 = arith.constant dense<0.000000e+00> : vector<8x8xf32>
    %14 = tpu.matmul %11, %13, %cst_4 {dimension_numbers = #tpu.dot_dimension_numbers<[1], [1], [0], [0], [0, 0, 1, 0], [], []>} : vector<8x32xf32>, vector<8x32xf32>, vector<8x8xf32> -> vector<8x8xf32>
    %15 = math.absf %14 : vector<8x8xf32>
    %c0_i32 = arith.constant 0 : i32
    %16 = arith.cmpi eq, %arg1, %c0_i32 : i32
    %17 = arith.extui %16 : i1 to i32
    %c0_i32_5 = arith.constant 0 : i32
    %18 = arith.cmpi ne, %17, %c0_i32_5 : i32
    scf.if %18 {
      %cst_12 = arith.constant 0.000000e+00 : f32
      %c0_13 = arith.constant 0 : index
      %c0_14 = arith.constant 0 : index
      %29 = memref.load %arg4[%c0_13, %c0_14] : memref<1x1xf32, #tpu.memory_space<smem>>
      memref.store %cst_12, %arg4[%c0_13, %c0_14] : memref<1x1xf32, #tpu.memory_space<smem>>
    } else {
    }
    %c0_6 = arith.constant 0 : index
    %c0_7 = arith.constant 0 : index
    %19 = memref.load %arg4[%c0_6, %c0_7] : memref<1x1xf32, #tpu.memory_space<smem>>
    %20 = vector.shape_cast %15 : vector<8x8xf32> to vector<1x8x8xf32>
    %cst_8 = arith.constant dense<0.000000e+00> : vector<1xf32>
    %21 = vector.multi_reduction <add>, %20, %cst_8 [1, 2] : vector<1x8x8xf32> to vector<1xf32>
    %22 = vector.shape_cast %21 : vector<1xf32> to vector<1x1x1xf32>
    %23 = vector.extract %22[0, 0, 0] : f32 from vector<1x1x1xf32>
    %24 = arith.addf %19, %23 : f32
    %c0_9 = arith.constant 0 : index
    %c0_10 = arith.constant 0 : index
    %25 = memref.load %arg4[%c0_9, %c0_10] : memref<1x1xf32, #tpu.memory_space<smem>>
    memref.store %24, %arg4[%c0_9, %c0_10] : memref<1x1xf32, #tpu.memory_space<smem>>
    %26 = arith.cmpi eq, %arg0, %arg1 : i32
    %27 = arith.extui %26 : i1 to i32
    %c0_i32_11 = arith.constant 0 : i32
    %28 = arith.cmpi ne, %27, %c0_i32_11 : i32
    scf.if %28 {
      %29 = tpu.iota {dimensions = array<i32: 0>} : vector<8x8xi32>
      %30 = tpu.iota {dimensions = array<i32: 1>} : vector<8x8xi32>
      %c0_12 = arith.constant 0 : index
      %c0_13 = arith.constant 0 : index
      %31 = memref.load %arg4[%c0_12, %c0_13] : memref<1x1xf32, #tpu.memory_space<smem>>
      %32 = arith.cmpi eq, %29, %30 : vector<8x8xi32>
      %cst_14 = arith.constant 0.000000e+00 : f32
      %33 = vector.broadcast %cst_14 : f32 to vector<8x8xf32>
      %34 = arith.select %32, %15, %33 : vector<8x8xi1>, vector<8x8xf32>
      %35 = vector.shape_cast %34 : vector<8x8xf32> to vector<1x8x8xf32>
      %cst_15 = arith.constant dense<0.000000e+00> : vector<1xf32>
      %36 = vector.multi_reduction <add>, %35, %cst_15 [1, 2] : vector<1x8x8xf32> to vector<1xf32>
      %37 = vector.shape_cast %36 : vector<1xf32> to vector<1x1x1xf32>
      %38 = vector.extract %37[0, 0, 0] : f32 from vector<1x1x1xf32>
      %39 = arith.subf %31, %38 : f32
      %c0_16 = arith.constant 0 : index
      %c0_17 = arith.constant 0 : index
      %40 = memref.load %arg4[%c0_16, %c0_17] : memref<1x1xf32, #tpu.memory_space<smem>>
      memref.store %39, %arg4[%c0_16, %c0_17] : memref<1x1xf32, #tpu.memory_space<smem>>
    } else {
    }
    return
  }
  func.func @transform_0(%arg0: i32, %arg1: i32) -> (i32, i32) {
    %c0_i32 = arith.constant 0 : i32
    %c0_i32_0 = arith.constant 0 : i32
    return %arg0, %c0_i32 : i32, i32
  }
  func.func @transform_1(%arg0: i32, %arg1: i32) -> (i32, i32) {
    %c0_i32 = arith.constant 0 : i32
    %c0_i32_0 = arith.constant 0 : i32
    return %arg1, %c0_i32 : i32, i32
  }
  func.func @transform_2(%arg0: i32, %arg1: i32) -> (i32, i32) {
    %c0_i32 = arith.constant 0 : i32
    %c0_i32_0 = arith.constant 0 : i32
    return %arg0, %c0_i32 : i32, i32
  }
}

</mosaic_0001>

<llo_original>
// kernel: tpu_custom_call.1
$region0: #{tpu_custom_call.1}
  #allocation0 [shape = 'u32[]', space=smem, size = 0x4, offset = 0x4, fixed_abs, tag = 'smem constant byte address 0x4 - core index']
  #allocation1 [shape = 'u32[144,128]{1,0:T(1,128)}', space=vmem, size = 0x12000, scoped, tag = 'internal scratch']
  %s0 = inlined_call_operand.hbm [shape: f32[8,32], index: 0, kind: input, shape index: {}]
  %s1 = inlined_call_operand.hbm [shape: f32[8,32], index: 1, kind: input, shape index: {}]
  %s2 = inlined_call_operand.hbm [shape: f32[1,1], index: 2, kind: output, shape index: {}]
  %s3 = sld [smem:[#allocation0]]
  $region34: #{tpu_custom_call.1} parent=0
    _
  %s5 = ssub.s32 1, %s3
  %s6 = scalar_select 0, %s5, %s3
  $region1: #{tpu_custom_call.1} parent=0
    #allocation2 [shape = 'u8[4096]{0}', space=vmem, size = 0x1000, scoped, tag = 'input window, operand 0, single buffered']
    #allocation3 [shape = 's32[1]{0}', space=sflag, size = 0x4, scoped, tag = 'scoped memory for tpu_custom_call.1']
    #allocation4 [shape = 's32[1]{0}', space=sflag, size = 0x4, scoped, tag = 'scoped memory for tpu_custom_call.1']
    #allocation5 [shape = 'u8[4096]{0}', space=vmem, size = 0x1000, scoped, tag = 'input window, operand 1, single buffered']
    #allocation6 [shape = 's32[1]{0}', space=sflag, size = 0x4, scoped, tag = 'scoped memory for tpu_custom_call.1']
    #allocation7 [shape = 'u8[512]{0}', space=smem, size = 0x200, scoped, tag = 'output window, operand 0, single buffered']
    %7 = vsyncpa [#allocation3], 0
    %8 = vsyncpa [#allocation6], 0
    %9 = vsyncpa [#allocation4], 0
    // Predicated region
    $region2: #{tpu_custom_call.1} parent=1 // pred_check
      _
    $region3: #{tpu_custom_call.1} parent=1 // pred_check_branch
      %11 = sbr.rel (0) target = $region5
    $region4: #{tpu_custom_call.1} parent=1 // pred_region
      %s13 = ssub.s32 128, 128
      %14 = vsyncadd [#allocation3], %s13
      %s16 = sshll.u32 [#allocation2], 4
      %s17 = int_to_ptr.vmem [resolvable:$true] %s16
      %19 = dma.hbm_to_vmem [thread:$0]  %s0, 128, %s17, [#allocation3]
    $region5: #{tpu_custom_call.1} parent=1 // pred_fallthru
      _
    // Predicated region
    $region6: #{tpu_custom_call.1} parent=1 // pred_check
      _
    $region7: #{tpu_custom_call.1} parent=1 // pred_check_branch
      %21 = sbr.rel (0) target = $region9
    $region8: #{tpu_custom_call.1} parent=1 // pred_region
      %s23 = ssub.s32 128, 128
      %24 = vsyncadd [#allocation6], %s23
      %s26 = sshll.u32 [#allocation5], 4
      %s27 = int_to_ptr.vmem [resolvable:$true] %s26
      %29 = dma.hbm_to_vmem [thread:$0]  %s1, 128, %s27, [#allocation6]
    $region9: #{tpu_custom_call.1} parent=1 // pred_fallthru
      _
    // Predicated region
    $region10: #{tpu_custom_call.1} parent=1 // pred_check
      _
    $region11: #{tpu_custom_call.1} parent=1 // pred_check_branch
      %31 = sbr.rel (0) target = $region13
    $region12: #{tpu_custom_call.1} parent=1 // pred_region
      %32 = dma.done [#allocation3], 128
    $region13: #{tpu_custom_call.1} parent=1 // pred_fallthru
      _
    // Predicated region
    $region14: #{tpu_custom_call.1} parent=1 // pred_check
      _
    $region15: #{tpu_custom_call.1} parent=1 // pred_check_branch
      %34 = sbr.rel (0) target = $region17
    $region16: #{tpu_custom_call.1} parent=1 // pred_region
      %35 = dma.done [#allocation6], 128
    $region17: #{tpu_custom_call.1} parent=1 // pred_fallthru
      _
    %v36 = vld [vmem:[#allocation2] sm:$0xff]
    %v37 = vld [vmem:[#allocation5] sm:$0xff]
    %v38 = vmul.f32 %v36, %v36
    %vm39 = vcmask 261120
    %v40 = vsel %vm39, %v38, 0.0
    %41 = vadd.xlane.f32.xlu0 %v40
    %v42 = vpop.xlane.xlu0 %41
    %v43 = vrsqrt.pop %v42
    %v44 = vmul.f32 %v37, %v37
    %v45 = vsel %vm39, %v44, 0.0
    %46 = vadd.xlane.f32.xlu0 %v45
    %v47 = vpop.xlane.xlu0 %46
    %v48 = vrsqrt.pop %v47
    %v49 = vmul.f32 %v36, %v43
    %v50 = vmul.f32 %v37, %v48
    %v52 = vsel %vm39, %v49, 0
    %v55 = vsel %vm39, %v50, 0
    %57 = vmatprep.subr.mxu0 0.0
    %58 = vmatpush1.xpose.msra.mxu0 0.0
    %59 = vmatprep.subr.mxu0 0.0
    %60 = vmatpush1.xpose.msra.mxu0 0.0
    %61 = vmatprep.subr.mxu0 0.0
    %62 = vmatpush1.xpose.msra.mxu0 0.0
    %63 = vmatprep.subr.mxu0 0.0
    %64 = vmatpush1.xpose.msra.mxu0 0.0
    %65 = vmatprep.subr.mxu0 0.0
    %66 = vmatpush1.xpose.msra.mxu0 0.0
    %67 = vmatprep.subr.mxu0 0.0
    %68 = vmatpush1.xpose.msra.mxu0 0.0
    %69 = vmatprep.subr.mxu0 0.0
    %70 = vmatpush1.xpose.msra.mxu0 0.0
    %71 = vmatprep.subr.mxu0 0.0
    %72 = vmatpush1.xpose.msra.mxu0 0.0
    %73 = vmatprep.subr.mxu0 0.0
    %74 = vmatpush1.xpose.msra.mxu0 0.0
    %75 = vmatprep.subr.mxu0 0.0
    %76 = vmatpush1.xpose.msra.mxu0 0.0
    %77 = vmatprep.subr.mxu0 0.0
    %78 = vmatpush1.xpose.msra.mxu0 0.0
    %79 = vmatprep.subr.mxu0 0.0
    %80 = vmatpush1.xpose.msra.mxu0 0.0
    %81 = vmatprep.subr.mxu0 0.0
    %82 = vmatpush1.xpose.msra.mxu0 0.0
    %83 = vmatprep.subr.mxu0 0.0
    %84 = vmatpush1.xpose.msra.mxu0 0.0
    %85 = vmatprep.subr.mxu0 0.0
    %86 = vmatpush1.xpose.msra.mxu0 0.0
    %87 = vmatprep.subr.mxu0 0.0
    %88 = vmatpush1.xpose.msra.mxu0 %v55
    %89 = vmatprep.subr.mxu0 0.0
    %90 = vmatpush2.xpose.msra.mxu0 0.0
    %91 = vmatprep.subr.mxu0 0.0
    %92 = vmatpush2.xpose.msra.mxu0 0.0
    %93 = vmatprep.subr.mxu0 0.0
    %94 = vmatpush2.xpose.msra.mxu0 0.0
    %95 = vmatprep.subr.mxu0 0.0
    %96 = vmatpush2.xpose.msra.mxu0 0.0
    %97 = vmatprep.subr.mxu0 0.0
    %98 = vmatpush2.xpose.msra.mxu0 0.0
    %99 = vmatprep.subr.mxu0 0.0
    %100 = vmatpush2.xpose.msra.mxu0 0.0
    %101 = vmatprep.subr.mxu0 0.0
    %102 = vmatpush2.xpose.msra.mxu0 0.0
    %103 = vmatprep.subr.mxu0 0.0
    %104 = vmatpush2.xpose.msra.mxu0 0.0
    %105 = vmatprep.subr.mxu0 0.0
    %106 = vmatpush2.xpose.msra.mxu0 0.0
    %107 = vmatprep.subr.mxu0 0.0
    %108 = vmatpush2.xpose.msra.mxu0 0.0
    %109 = vmatprep.subr.mxu0 0.0
    %110 = vmatpush2.xpose.msra.mxu0 0.0
    %111 = vmatprep.subr.mxu0 0.0
    %112 = vmatpush2.xpose.msra.mxu0 0.0
    %113 = vmatprep.subr.mxu0 0.0
    %114 = vmatpush2.xpose.msra.mxu0 0.0
    %115 = vmatprep.subr.mxu0 0.0
    %116 = vmatpush2.xpose.msra.mxu0 0.0
    %117 = vmatprep.subr.mxu0 0.0
    %118 = vmatpush2.xpose.msra.mxu0 0.0
    %119 = vmatprep.subr.mxu0 0.0
    %120 = vmatpush2.xpose.msra.mxu0 0.0
    %121 = vmatprep.mubr.f32.mxu0 0.0
    %122 = vmatmul.mubr.f32.gmra.mxu0 %v52
    %v123 = vpop.f32.mrf.mxu0
    %v124 = vadd.f32 0.0, %v123
    %v125 = vpop.f32.mrf.mxu0
    %126 = vdwg.mxu0
    %v127 = vand.u32 2147483647, %v124
    %p128 = scmp.eq.s32.totalorder 0, 0
    // Predicated region
    $region18: #{tpu_custom_call.1} parent=1 // pred_check
      %p129 = pneg %p128
    $region19: #{tpu_custom_call.1} parent=1 // pred_check_branch
      %131 = sbr.rel (%p129) target = $region21
    $region20: #{tpu_custom_call.1} parent=1 // pred_region
      %s132 = scalar_lea.smem [#allocation7], 0
      %133 = sst [smem:[%s132]] 0.0
    $region21: #{tpu_custom_call.1} parent=1 // pred_fallthru
      _
    %s134 = sld [smem:[#allocation7]]
    %vm135 = vcmask 64512
    %v136 = vsel %vm135, %v127, 0.0
    %137 = vadd.xlane.f32.xlu0 %v136
    %v138 = vpop.xlane.xlu0 %137
    %v139 = vrot.slane %v138, 4
    %v140 = vadd.f32 %v138, %v139
    %v141 = vrot.slane %v140, 2
    %v142 = vadd.f32 %v140, %v141
    %v143 = vrot.slane %v142, 1
    %v144 = vadd.f32 %v142, %v143
    %s145 = vtos %v144
    %s146 = sadd.f32 %s134, %s145
    %s147 = scalar_lea.smem [#allocation7], 0
    %148 = sst [smem:[%s147]] %s146
    %p149 = scmp.eq.s32.totalorder 0, 0
    // Predicated region
    $region22: #{tpu_custom_call.1} parent=1 // pred_check
      %p150 = pneg %p149
    $region23: #{tpu_custom_call.1} parent=1 // pred_check_branch
      %152 = sbr.rel (%p150) target = $region25
    $region24: #{tpu_custom_call.1} parent=1 // pred_region
      %v153 = vlaneseq
      %v154 = vshrl.u32 %v153, 7
      %v155 = vlaneseq
      %v156 = vand.u32 %v155, 127
      %s157 = sld [smem:[#allocation7]]
      %vm158 = vcmp.eq.s32.totalorder %v154, %v156
      %v159 = vsel %vm158, %v127, 0.0
      %v160 = vsel %vm135, %v159, 0.0
      %161 = vadd.xlane.f32.xlu0 %v160
      %v162 = vpop.xlane.xlu0 %161
      %v163 = vrot.slane %v162, 4
      %v164 = vadd.f32 %v162, %v163
      %v165 = vrot.slane %v164, 2
      %v166 = vadd.f32 %v164, %v165
      %v167 = vrot.slane %v166, 1
      %v168 = vadd.f32 %v166, %v167
      %s169 = vtos %v168
      %s170 = ssub.f32 %s157, %s169
      %171 = sst [smem:[%s147]] %s170
    $region25: #{tpu_custom_call.1} parent=1 // pred_fallthru
      _
    // Predicated region
    $region26: #{tpu_custom_call.1} parent=1 // pred_check
      _
    $region27: #{tpu_custom_call.1} parent=1 // pred_check_branch
      %173 = sbr.rel (0) target = $region29
    $region28: #{tpu_custom_call.1} parent=1 // pred_region
      %s175 = ssub.s32 16, 16
      %176 = vsyncadd [#allocation4], %s175
      %179 = dma.smem_to_hbm [#allocation7], 16, %s2, [#allocation4]
    $region29: #{tpu_custom_call.1} parent=1 // pred_fallthru
      _
    // Predicated region
    $region30: #{tpu_custom_call.1} parent=1 // pred_check
      _
    $region31: #{tpu_custom_call.1} parent=1 // pred_check_branch
      %181 = sbr.rel (0) target = $region33
    $region32: #{tpu_custom_call.1} parent=1 // pred_region
      %182 = dma.done [#allocation4], 16
    $region33: #{tpu_custom_call.1} parent=1 // pred_fallthru
      _
    %183 = sfence
    %184 = vsyncpa [#allocation3], 1
    %185 = vsyncpa [#allocation6], 1
    %186 = vsyncpa [#allocation4], 1

</llo_original>
